<compile_context>
chip_gen: v7x
topology: tpu7x:2x2x1
jax: 0.10.0
libtpu: 0.0.40
codegen_flags: <defaults>
</compile_context>

<pallas_src>
import functools

import jax
import jax.numpy as jnp
from jax.experimental import pallas as pl
from jax.experimental.pallas import tpu as pltpu

LN_EPS = 1e-5  # nn.LayerNorm default


def _round_up(a, b):
    return (a + b - 1) // b * b


@functools.lru_cache(maxsize=1)
def _vmem_budget_bytes():
    """Per-generation VMEM budget with headroom for compiler scratch."""
    try:
        cap = int(getattr(pltpu.get_tpu_info(), "vmem_capacity_bytes"))
    except Exception:
        cap = 64 << 20  # conservative fallback: legal on every generation
    return (cap * 7) // 8  # ~56 MiB on v7x, ~112 MiB on v5e/v6e


def ffn_kernel(x_ref, w1_ref, b1_ref, w2_ref, p_ref, o_ref, acc_ref):
    """One (row-tile i, k-slab) grid step.

    x_ref  : (tm, H)  input rows (resident across the k axis)
    w1_ref : (H, tk)  fc1 weight slab, pre-transposed to (in, out)
    b1_ref : (1, tk)  fc1 bias slab
    w2_ref : (tk, H)  fc2 weight slab (in, out)
    p_ref  : (3, H)   packed [b2; ln_gamma; ln_beta]
    o_ref  : (tm, H)  output rows
    acc_ref: (tm, H)  f32 partial-fc2 accumulator (scratch)
    """
    k = pl.program_id(1)

    @pl.when(k == 0)
    def _init():
        acc_ref[...] = jnp.zeros_like(acc_ref)

    x_f32 = x_ref[...].astype(jnp.float32)

    # fc1 slab + ReLU (MXU, f32 accumulation).
    h = jnp.dot(x_f32.astype(w1_ref.dtype), w1_ref[...],
                preferred_element_type=jnp.float32)
    h = jnp.maximum(h + b1_ref[...].astype(jnp.float32), 0.0)

    # Partial fc2 contribution of this k slab.
    acc_ref[...] += jnp.dot(h.astype(w2_ref.dtype), w2_ref[...],
                            preferred_element_type=jnp.float32)

    @pl.when(k == pl.num_programs(1) - 1)
    def _finalize():
        b2 = p_ref[0:1, :]
        gamma = p_ref[1:2, :]
        beta = p_ref[2:3, :]
        y = x_f32 + acc_ref[...] + b2
        # LayerNorm, torch semantics: biased variance (one reduction pass via
        # E[y^2] - mean^2), eps inside rsqrt.
        mean = jnp.mean(y, axis=-1, keepdims=True)
        var = jnp.mean(y * y, axis=-1, keepdims=True) - mean * mean
        y_hat = (y - mean) * jax.lax.rsqrt(var + LN_EPS)
        o_ref[...] = (y_hat * gamma + beta).astype(o_ref.dtype)


def prepare_ffn_params(w1, b1, w2, b2, gamma, beta, *, weights_dtype=jnp.float32):
    """One-time host prep (call once, reuse every forward).

    w1, w2 are in torch nn.Linear layout (out_features, in_features); they are
    transposed once so the kernel computes x @ W == torch's x @ W.T.
    weights_dtype=jnp.bfloat16 halves weight VMEM/DMA and uses the bf16-native
    MXU path (accumulation stays f32); default f32 matches torch exactly.
    """
    w1t = jnp.asarray(w1).astype(weights_dtype).T          # (in, out)
    w2t = jnp.asarray(w2).astype(weights_dtype).T          # (in, out)
    b1r = jnp.asarray(b1, jnp.float32).reshape(1, -1)      # (1, H)
    pack = jnp.stack([jnp.asarray(b2, jnp.float32),
                      jnp.asarray(gamma, jnp.float32),
                      jnp.asarray(beta, jnp.float32)], axis=0)  # (3, H)
    return w1t, b1r, w2t, pack


def _plan_tiles(rows, H, wbytes, row_tile, k_tile):
    """Pick (row tile, k tile, vmem_limit) that fit the generation's VMEM."""
    # Row tile: large (amortizes ~0.35us/step overhead), multiple of 8; a
    # single full-extent block when rows are small (block == array dim is legal).
    tm = min(_round_up(max(int(row_tile), 8), 8), _round_up(rows, 8))
    if tm >= rows:
        tm = rows

    budget = _vmem_budget_bytes()
    # Non-weight residents: x/out tiles (double-buffered), acc scratch, packed
    # LN params, plus fixed headroom for compiler-internal scratch.
    fixed = 5 * tm * H * 4 + 2 * 8 * H * 4 + (4 << 20)
    per_tk = 4 * H * wbytes + 2 * 8 * 4  # w1 + w2 slabs (double-buffered) + b1 slab

    if k_tile is not None:
        tk = int(k_tile)
        if tk != H and (H % tk != 0 or tk % 128 != 0):
            raise ValueError("k_tile must equal H or be a multiple of 128 that divides H")
    elif H % 128 != 0:
        # Lane-sparse hidden size: keep the intermediate dim un-tiled (see TODO).
        tk = H
    else:
        tk_fit = max(0, (budget - fixed) // per_tk)
        if tk_fit >= H:
            tk = H  # weights fully VMEM-resident, DMA'd from HBM exactly once
        else:
            tk = 0
            d = 128
            while d <= H:
                if H % d == 0 and d <= tk_fit:
                    tk = d
                d += 128
            tk = tk or 128  # minimum slab; budget re-checked below

    need = fixed + per_tk * tk
    if need > budget:
        raise ValueError(
            f"FFN tiling does not fit VMEM: need ~{need >> 20} MiB, budget "
            f"{budget >> 20} MiB. Reduce row_tile, use bf16 weights "
            f"(prepare_ffn_params(..., weights_dtype=jnp.bfloat16)), or pass a "
            f"smaller k_tile.")
    vmem_limit = min(budget, max(need, 32 << 20))
    return tm, tk, int(vmem_limit)


@functools.partial(jax.jit, static_argnames=("row_tile", "k_tile"))
def ffn_forward(x, w1t, b1r, w2t, pack, *, row_tile=256, k_tile=None):
    """FFN forward: LayerNorm(x + fc2(relu(fc1(x)))).

    x: (batch, seq, hidden) float32.  w1t/b1r/w2t/pack from prepare_ffn_params.
    row_tile: rows per grid step (256 default; 512 is a good choice on
    v5e/v6e's 128 MiB VMEM, keep ~256 on v7x's 64 MiB).
    """
    B, S, H = x.shape
    rows = B * S
    x2d = x.reshape(rows, H)
    wbytes = jnp.dtype(w1t.dtype).itemsize

    tm, tk, vmem_limit = _plan_tiles(rows, H, wbytes, row_tile, k_tile)
    grid = (pl.cdiv(rows, tm), H // tk)

    row_spec = pl.BlockSpec((tm, H), lambda i, k: (i, 0))
    w1_spec = pl.BlockSpec((H, tk), lambda i, k: (0, k))
    b1_spec = pl.BlockSpec((1, tk), lambda i, k: (0, k))
    w2_spec = pl.BlockSpec((tk, H), lambda i, k: (k, 0))
    p_spec = pl.BlockSpec((3, H), lambda i, k: (0, 0))

    weight_hbm_bytes = 2 * H * H * wbytes * (1 if tk == H else grid[0])
    cost = pl.CostEstimate(
        flops=4 * rows * H * H,            # two (rows,H)x(H,H) matmuls
        transcendentals=rows,              # one rsqrt per row
        bytes_accessed=2 * rows * H * 4 + weight_hbm_bytes + 5 * H * 4,
    )

    out2d = pl.pallas_call(
        ffn_kernel,
        out_shape=jax.ShapeDtypeStruct((rows, H), x.dtype),
        grid_spec=pltpu.PrefetchScalarGridSpec(
            num_scalar_prefetch=0,
            grid=grid,
            in_specs=[row_spec, w1_spec, b1_spec, w2_spec, p_spec],
            out_specs=row_spec,
            scratch_shapes=[pltpu.VMEM((tm, H), jnp.float32)],
        ),
        compiler_params=pltpu.CompilerParams(
            dimension_semantics=("parallel", "arbitrary"),
            vmem_limit_bytes=vmem_limit,
        ),
        cost_estimate=cost,
    )(x2d, w1t, b1r, w2t, pack)

    return out2d.reshape(B, S, H)


def reference_ffn(x, w1, b1, w2, b2, gamma, beta):
    # torch-layout reference: nn.Linear is x @ W.T + b
    h = jnp.maximum(x @ w1.T + b1, 0.0)
    y = x + h @ w2.T + b2
    mean = jnp.mean(y, axis=-1, keepdims=True)
    var = jnp.mean((y - mean) ** 2, axis=-1, keepdims=True)
    return (y - mean) / jnp.sqrt(var + LN_EPS) * gamma + beta


if __name__ == "__main__":
    B, S, H = 2, 8, 32  # batch, seq, hidden (small test shape)

    key = jax.random.PRNGKey(0)
    kx, k1, kb1, k2, kb2 = jax.random.split(key, 5)

    x = jax.random.normal(kx, (B, S, H), dtype=jnp.float32)

    # nn.Linear-style params in torch layout: W (out_features, in_features), b (out_features,)
    bound = 1.0 / (H ** 0.5)
    w1 = jax.random.uniform(k1, (H, H), jnp.float32, -bound, bound)
    b1 = jax.random.uniform(kb1, (H,), jnp.float32, -bound, bound)
    w2 = jax.random.uniform(k2, (H, H), jnp.float32, -bound, bound)
    b2 = jax.random.uniform(kb2, (H,), jnp.float32, -bound, bound)
    gamma = jnp.ones((H,), jnp.float32)   # nn.LayerNorm default weight
    beta = jnp.zeros((H,), jnp.float32)   # nn.LayerNorm default bias

    # One-time host prep (transpose to x@W layout, pack biases / LN params).
    params = prepare_ffn_params(w1, b1, w2, b2, gamma, beta)

    out = ffn_forward(x, *params)
    out = jax.block_until_ready(out)

    ref = reference_ffn(x, w1, b1, w2, b2, gamma, beta)
    assert out.shape == (B, S, H)
    assert jnp.allclose(out, ref, atol=1e-4, rtol=1e-4), "mismatch vs reference"

    print("KERNEL_OK")
</pallas_src>

<mosaic_0001>
module attributes {stable_mosaic.version = 11 : i64} {
  func.func @ffn_kernel(%arg0: i32, %arg1: i32, %arg2: memref<16x32xf32, #tpu.memory_space<vmem>>, %arg3: memref<32x32xf32, #tpu.memory_space<vmem>>, %arg4: memref<1x32xf32, #tpu.memory_space<vmem>>, %arg5: memref<32x32xf32, #tpu.memory_space<vmem>>, %arg6: memref<3x32xf32, #tpu.memory_space<vmem>>, %arg7: memref<16x32xf32, #tpu.memory_space<vmem>>, %arg8: memref<16x32xf32, #tpu.memory_space<vmem>>) attributes {dimension_semantics = [#tpu.dimension_semantics<parallel>, #tpu.dimension_semantics<arbitrary>], iteration_bounds = array<i64: 1, 1>, scalar_prefetch = 0 : i64, scratch_operands = 1 : i64, tpu.core_type = #tpu.core_type<tc>, window_params = [{transform_indices = @transform_0, window_bounds = array<i64: 16, 32>}, {transform_indices = @transform_1, window_bounds = array<i64: 32, 32>}, {transform_indices = @transform_2, window_bounds = array<i64: 1, 32>}, {transform_indices = @transform_3, window_bounds = array<i64: 32, 32>}, {pipeline_mode = #tpu.pipeline_mode<synchronous>, transform_indices = @transform_4, window_bounds = array<i64: 3, 32>}, {transform_indices = @transform_5, window_bounds = array<i64: 16, 32>}]} {
    %c0_i32 = arith.constant 0 : i32
    %0 = arith.cmpi eq, %arg1, %c0_i32 : i32
    %1 = arith.extui %0 : i1 to i32
    %c0_i32_0 = arith.constant 0 : i32
    %2 = arith.cmpi ne, %1, %c0_i32_0 : i32
    scf.if %2 {
      %cst_16 = arith.constant 0.000000e+00 : f32
      %19 = vector.broadcast %cst_16 : f32 to vector<16x32xf32>
      %c0_17 = arith.constant 0 : index
      %c0_18 = arith.constant 0 : index
      %20 = vector.load %arg8[%c0_17, %c0_18] : memref<16x32xf32, #tpu.memory_space<vmem>>, vector<16x32xf32>
      tpu.vector_store %arg8[%c0_17, %c0_18], %19 {strides = array<i32>} : memref<16x32xf32, #tpu.memory_space<vmem>>, vector<16x32xf32>,
    } else {
    }
    %c0 = arith.constant 0 : index
    %c0_1 = arith.constant 0 : index
    %3 = vector.load %arg2[%c0, %c0_1] : memref<16x32xf32, #tpu.memory_space<vmem>>, vector<16x32xf32>
    %c0_2 = arith.constant 0 : index
    %c0_3 = arith.constant 0 : index
    %4 = vector.load %arg3[%c0_2, %c0_3] : memref<32x32xf32, #tpu.memory_space<vmem>>, vector<32x32xf32>
    %cst = arith.constant dense<0.000000e+00> : vector<16x32xf32>
    %5 = tpu.matmul %3, %4, %cst {dimension_numbers = #tpu.dot_dimension_numbers<[1], [0], [0], [1], [0, 0, 1, 1], [], []>} : vector<16x32xf32>, vector<32x32xf32>, vector<16x32xf32> -> vector<16x32xf32>
    %c0_4 = arith.constant 0 : index
    %c0_5 = arith.constant 0 : index
    %6 = vector.load %arg4[%c0_4, %c0_5] : memref<1x32xf32, #tpu.memory_space<vmem>>, vector<1x32xf32>
    %7 = vector.broadcast %6 : vector<1x32xf32> to vector<16x32xf32>
    %8 = arith.addf %5, %7 : vector<16x32xf32>
    %cst_6 = arith.constant 0.000000e+00 : f32
    %9 = vector.broadcast %cst_6 : f32 to vector<16x32xf32>
    %10 = arith.maximumf %8, %9 : vector<16x32xf32>
    %c0_7 = arith.constant 0 : index
    %c0_8 = arith.constant 0 : index
    %11 = vector.load %arg8[%c0_7, %c0_8] : memref<16x32xf32, #tpu.memory_space<vmem>>, vector<16x32xf32>
    %c0_9 = arith.constant 0 : index
    %c0_10 = arith.constant 0 : index
    %12 = vector.load %arg5[%c0_9, %c0_10] : memref<32x32xf32, #tpu.memory_space<vmem>>, vector<32x32xf32>
    %cst_11 = arith.constant dense<0.000000e+00> : vector<16x32xf32>
    %13 = tpu.matmul %10, %12, %cst_11 {dimension_numbers = #tpu.dot_dimension_numbers<[1], [0], [0], [1], [0, 0, 1, 1], [], []>} : vector<16x32xf32>, vector<32x32xf32>, vector<16x32xf32> -> vector<16x32xf32>
    %14 = arith.addf %11, %13 : vector<16x32xf32>
    %c0_12 = arith.constant 0 : index
    %c0_13 = arith.constant 0 : index
    %15 = vector.load %arg8[%c0_12, %c0_13] : memref<16x32xf32, #tpu.memory_space<vmem>>, vector<16x32xf32>
    tpu.vector_store %arg8[%c0_12, %c0_13], %14 {strides = array<i32>} : memref<16x32xf32, #tpu.memory_space<vmem>>, vector<16x32xf32>,
    %c0_i32_14 = arith.constant 0 : i32
    %16 = arith.cmpi eq, %arg1, %c0_i32_14 : i32
    %17 = arith.extui %16 : i1 to i32
    %c0_i32_15 = arith.constant 0 : i32
    %18 = arith.cmpi ne, %17, %c0_i32_15 : i32
    scf.if %18 {
      %c0_16 = arith.constant 0 : index
      %c0_17 = arith.constant 0 : index
      %19 = vector.load %arg6[%c0_16, %c0_17] : memref<3x32xf32, #tpu.memory_space<vmem>>, vector<1x32xf32>
      %c1 = arith.constant 1 : index
      %c0_18 = arith.constant 0 : index
      %20 = vector.load %arg6[%c1, %c0_18] : memref<3x32xf32, #tpu.memory_space<vmem>>, vector<1x32xf32>
      %c2 = arith.constant 2 : index
      %c0_19 = arith.constant 0 : index
      %21 = vector.load %arg6[%c2, %c0_19] : memref<3x32xf32, #tpu.memory_space<vmem>>, vector<1x32xf32>
      %c0_20 = arith.constant 0 : index
      %c0_21 = arith.constant 0 : index
      %22 = vector.load %arg8[%c0_20, %c0_21] : memref<16x32xf32, #tpu.memory_space<vmem>>, vector<16x32xf32>
      %23 = arith.addf %3, %22 : vector<16x32xf32>
      %24 = vector.broadcast %19 : vector<1x32xf32> to vector<16x32xf32>
      %25 = arith.addf %23, %24 : vector<16x32xf32>
      %cst_22 = arith.constant dense<0.000000e+00> : vector<16xf32>
      %26 = vector.multi_reduction <add>, %25, %cst_22 [1] : vector<16x32xf32> to vector<16xf32>
      %27 = vector.shape_cast %26 : vector<16xf32> to vector<16x1xf32>
      %cst_23 = arith.constant 3.200000e+01 : f32
      %28 = vector.broadcast %cst_23 : f32 to vector<16x1xf32>
      %29 = arith.divf %27, %28 : vector<16x1xf32>
      %30 = arith.mulf %25, %25 : vector<16x32xf32>
      %cst_24 = arith.constant dense<0.000000e+00> : vector<16xf32>
      %31 = vector.multi_reduction <add>, %30, %cst_24 [1] : vector<16x32xf32> to vector<16xf32>
      %32 = vector.shape_cast %31 : vector<16xf32> to vector<16x1xf32>
      %cst_25 = arith.constant 3.200000e+01 : f32
      %33 = vector.broadcast %cst_25 : f32 to vector<16x1xf32>
      %34 = arith.divf %32, %33 : vector<16x1xf32>
      %35 = arith.mulf %29, %29 : vector<16x1xf32>
      %36 = arith.subf %34, %35 : vector<16x1xf32>
      %37 = vector.broadcast %29 : vector<16x1xf32> to vector<16x32xf32>
      %38 = arith.subf %25, %37 : vector<16x32xf32>
      %cst_26 = arith.constant 9.99999974E-6 : f32
      %39 = vector.broadcast %cst_26 : f32 to vector<16x1xf32>
      %40 = arith.addf %36, %39 : vector<16x1xf32>
      %41 = math.rsqrt %40 : vector<16x1xf32>
      %42 = vector.broadcast %41 : vector<16x1xf32> to vector<16x32xf32>
      %43 = arith.mulf %38, %42 : vector<16x32xf32>
      %44 = vector.broadcast %20 : vector<1x32xf32> to vector<16x32xf32>
      %45 = arith.mulf %43, %44 : vector<16x32xf32>
      %46 = vector.broadcast %21 : vector<1x32xf32> to vector<16x32xf32>
      %47 = arith.addf %45, %46 : vector<16x32xf32>
      %c0_27 = arith.constant 0 : index
      %c0_28 = arith.constant 0 : index
      %48 = vector.load %arg7[%c0_27, %c0_28] : memref<16x32xf32, #tpu.memory_space<vmem>>, vector<16x32xf32>
      tpu.vector_store %arg7[%c0_27, %c0_28], %47 {strides = array<i32>} : memref<16x32xf32, #tpu.memory_space<vmem>>, vector<16x32xf32>,
    } else {
    }
    return
  }
  func.func @transform_0(%arg0: i32, %arg1: i32) -> (i32, i32) {
    %c0_i32 = arith.constant 0 : i32
    %c0_i32_0 = arith.constant 0 : i32
    return %arg0, %c0_i32 : i32, i32
  }
  func.func @transform_1(%arg0: i32, %arg1: i32) -> (i32, i32) {
    %c0_i32 = arith.constant 0 : i32
    %c0_i32_0 = arith.constant 0 : i32
    return %c0_i32, %arg1 : i32, i32
  }
  func.func @transform_2(%arg0: i32, %arg1: i32) -> (i32, i32) {
    %c0_i32 = arith.constant 0 : i32
    %c0_i32_0 = arith.constant 0 : i32
    return %c0_i32, %arg1 : i32, i32
  }
  func.func @transform_3(%arg0: i32, %arg1: i32) -> (i32, i32) {
    %c0_i32 = arith.constant 0 : i32
    %c0_i32_0 = arith.constant 0 : i32
    return %arg1, %c0_i32 : i32, i32
  }
  func.func @transform_4(%arg0: i32, %arg1: i32) -> (i32, i32) {
    %c0_i32 = arith.constant 0 : i32
    %c0_i32_0 = arith.constant 0 : i32
    %c0_i32_1 = arith.constant 0 : i32
    return %c0_i32, %c0_i32_0 : i32, i32
  }
  func.func @transform_5(%arg0: i32, %arg1: i32) -> (i32, i32) {
    %c0_i32 = arith.constant 0 : i32
    %c0_i32_0 = arith.constant 0 : i32
    return %arg0, %c0_i32 : i32, i32
  }
}

</mosaic_0001>

<llo_original>
// kernel: ffn_forward.1
$region0: #{ffn_forward.1}
  #allocation0 [shape = 'u32[]', space=smem, size = 0x4, offset = 0x4, fixed_abs, tag = 'smem constant byte address 0x4 - core index']
  #allocation1 [shape = 'u32[144,128]{1,0:T(1,128)}', space=vmem, size = 0x12000, scoped, tag = 'internal scratch']
  #allocation2 [shape = 'f32[16,32]{1,0:T(8,128)}', space=vmem, size = 0x2000, scoped, tag = 'scratch operand']
  %s0 = inlined_call_operand.hbm [shape: f32[16,32], index: 0, kind: input, shape index: {}]
  %s1 = inlined_call_operand.hbm [shape: f32[32,32], index: 1, kind: input, shape index: {}]
  %s2 = inlined_call_operand.vmem [shape: f32[1,32], index: 2, kind: input, shape index: {}]
  %s3 = inlined_call_operand.hbm [shape: f32[32,32], index: 3, kind: input, shape index: {}]
  %s4 = inlined_call_operand.vmem [shape: f32[3,32], index: 4, kind: input, shape index: {}]
  %s5 = inlined_call_operand.hbm [shape: f32[16,32], index: 5, kind: output, shape index: {}]
  %s6 = sld [smem:[#allocation0]]
  $region50: #{ffn_forward.1} parent=0
    _
  %s8 = ssub.s32 1, %s6
  %s9 = scalar_select 0, %s8, %s6
  $region1: #{ffn_forward.1} parent=0
    #allocation3 [shape = 'u8[8192]{0}', space=vmem, size = 0x2000, scoped, tag = 'input window, operand 0, single buffered']
    #allocation4 [shape = 's32[1]{0}', space=sflag, size = 0x4, scoped, tag = 'scoped memory for ffn_forward.1']
    #allocation5 [shape = 's32[1]{0}', space=sflag, size = 0x4, scoped, tag = 'scoped memory for ffn_forward.1']
    #allocation6 [shape = 'u8[16384]{0}', space=vmem, size = 0x4000, scoped, tag = 'input window, operand 1, single buffered']
    #allocation7 [shape = 's32[1]{0}', space=sflag, size = 0x4, scoped, tag = 'scoped memory for ffn_forward.1']
    #allocation8 [shape = 'u8[16384]{0}', space=vmem, size = 0x4000, scoped, tag = 'input window, operand 3, single buffered']
    #allocation9 [shape = 'u8[8192]{0}', space=vmem, size = 0x2000, scoped, tag = 'output window, operand 0, single buffered']
    %10 = vsyncpa [#allocation4], 0
    %11 = vsyncpa [#allocation7], 0
    %12 = vsyncpa [#allocation5], 0
    // Predicated region
    $region2: #{ffn_forward.1} parent=1 // pred_check
      _
    $region3: #{ffn_forward.1} parent=1 // pred_check_branch
      %14 = sbr.rel (0) target = $region5
    $region4: #{ffn_forward.1} parent=1 // pred_region
      %s16 = ssub.s32 256, 256
      %17 = vsyncadd [#allocation4], %s16
      %s18 = sshll.u32 [#allocation3], 4
      %s19 = int_to_ptr.vmem [resolvable:$true] %s18
      %24 = dma.hbm_to_vmem [thread:$0]  %s0, 256, %s19, [#allocation4], 128, 128, 8
    $region5: #{ffn_forward.1} parent=1 // pred_fallthru
      _
    // Predicated region
    $region6: #{ffn_forward.1} parent=1 // pred_check
      _
    $region7: #{ffn_forward.1} parent=1 // pred_check_branch
      %26 = sbr.rel (0) target = $region9
    $region8: #{ffn_forward.1} parent=1 // pred_region
      %s28 = ssub.s32 512, 512
      %29 = vsyncadd [#allocation7], %s28
      %s30 = sshll.u32 [#allocation6], 4
      %s31 = int_to_ptr.vmem [resolvable:$true] %s30
      %36 = dma.hbm_to_vmem [thread:$0]  %s1, 512, %s31, [#allocation7], 128, 128, 8
    $region9: #{ffn_forward.1} parent=1 // pred_fallthru
      _
    // Predicated region
    $region10: #{ffn_forward.1} parent=1 // pred_check
      _
    $region11: #{ffn_forward.1} parent=1 // pred_check_branch
      %38 = sbr.rel (0) target = $region13
    $region12: #{ffn_forward.1} parent=1 // pred_region
      _
    $region13: #{ffn_forward.1} parent=1 // pred_fallthru
      _
    // Predicated region
    $region14: #{ffn_forward.1} parent=1 // pred_check
      _
    $region15: #{ffn_forward.1} parent=1 // pred_check_branch
      %40 = sbr.rel (0) target = $region17
    $region16: #{ffn_forward.1} parent=1 // pred_region
      %s42 = ssub.s32 512, 512
      %43 = vsyncadd [#allocation7], %s42
      %s44 = sshll.u32 [#allocation8], 4
      %s45 = int_to_ptr.vmem [resolvable:$true] %s44
      %50 = dma.hbm_to_vmem [thread:$0]  %s3, 512, %s45, [#allocation7], 128, 128, 8
    $region17: #{ffn_forward.1} parent=1 // pred_fallthru
      _
    // Predicated region
    $region18: #{ffn_forward.1} parent=1 // pred_check
      _
    $region19: #{ffn_forward.1} parent=1 // pred_check_branch
      %52 = sbr.rel (0) target = $region21
    $region20: #{ffn_forward.1} parent=1 // pred_region
      _
    $region21: #{ffn_forward.1} parent=1 // pred_fallthru
      _
    // Predicated region
    $region22: #{ffn_forward.1} parent=1 // pred_check
      _
    $region23: #{ffn_forward.1} parent=1 // pred_check_branch
      %54 = sbr.rel (0) target = $region25
    $region24: #{ffn_forward.1} parent=1 // pred_region
      %55 = dma.done [#allocation4], 256
    $region25: #{ffn_forward.1} parent=1 // pred_fallthru
      _
    // Predicated region
    $region26: #{ffn_forward.1} parent=1 // pred_check
      _
    $region27: #{ffn_forward.1} parent=1 // pred_check_branch
      %57 = sbr.rel (0) target = $region29
    $region28: #{ffn_forward.1} parent=1 // pred_region
      %58 = dma.done [#allocation7], 512
    $region29: #{ffn_forward.1} parent=1 // pred_fallthru
      _
    // Predicated region
    $region30: #{ffn_forward.1} parent=1 // pred_check
      _
    $region31: #{ffn_forward.1} parent=1 // pred_check_branch
      %60 = sbr.rel (0) target = $region33
    $region32: #{ffn_forward.1} parent=1 // pred_region
      %61 = dma.done [#allocation7], 512
    $region33: #{ffn_forward.1} parent=1 // pred_fallthru
      _
    %p62 = scmp.eq.s32.totalorder 0, 0
    // Predicated region
    $region34: #{ffn_forward.1} parent=1 // pred_check
      %p63 = pneg %p62
    $region35: #{ffn_forward.1} parent=1 // pred_check_branch
      %65 = sbr.rel (%p63) target = $region37
    $region36: #{ffn_forward.1} parent=1 // pred_region
      %vm66 = vcmask 261120
      %67 = vst.msk [vmem:[#allocation2] sm:$0xff] %vm66, 0.0
      %68 = vst.msk [vmem:[#allocation2 + $0x8] sm:$0xff] %vm66, 0.0
    $region37: #{ffn_forward.1} parent=1 // pred_fallthru
      _
    %v69 = vld [vmem:[#allocation3] sm:$0xff]
    %v70 = vld [vmem:[#allocation3 + $0x8] sm:$0xff]
    %v71 = vld [vmem:[#allocation6] sm:$0xff]
    %v72 = vld [vmem:[#allocation6 + $0x8] sm:$0xff]
    %v73 = vld [vmem:[#allocation6 + $0x10] sm:$0xff]
    %v74 = vld [vmem:[#allocation6 + $0x18] sm:$0xff]
    %v75 = vld [vmem:[%s2] sm:$0x1]
    %v77 = vlaneseq
    %v78 = vshrl.u32 %v77, 7
    %v79 = vsub.s32 0, %v78
    %v80 = vrot.slane %v75, %v79
    %vm82 = vcmask 261120
    %v84 = vsel %vm82, %v69, 0
    %v87 = vsel %vm82, %v70, 0
    %89 = vmatprep.subr.mxu0 0.0
    %90 = vmatpush1.msra.mxu0 %v71
    %91 = vmatprep.subr.mxu0 0.0
    %92 = vmatpush1.msra.mxu0 %v72
    %93 = vmatprep.subr.mxu0 0.0
    %94 = vmatpush1.msra.mxu0 %v73
    %95 = vmatprep.subr.mxu0 0.0
    %96 = vmatpush1.msra.mxu0 %v74
    %97 = vmatprep.subr.mxu0 0.0
    %98 = vmatpush1.msra.mxu0 0.0
    %99 = vmatprep.subr.mxu0 0.0
    %100 = vmatpush1.msra.mxu0 0.0
    %101 = vmatprep.subr.mxu0 0.0
    %102 = vmatpush1.msra.mxu0 0.0
    %103 = vmatprep.subr.mxu0 0.0
    %104 = vmatpush1.msra.mxu0 0.0
    %105 = vmatprep.subr.mxu0 0.0
    %106 = vmatpush1.msra.mxu0 0.0
    %107 = vmatprep.subr.mxu0 0.0
    %108 = vmatpush1.msra.mxu0 0.0
    %109 = vmatprep.subr.mxu0 0.0
    %110 = vmatpush1.msra.mxu0 0.0
    %111 = vmatprep.subr.mxu0 0.0
    %112 = vmatpush1.msra.mxu0 0.0
    %113 = vmatprep.subr.mxu0 0.0
    %114 = vmatpush1.msra.mxu0 0.0
    %115 = vmatprep.subr.mxu0 0.0
    %116 = vmatpush1.msra.mxu0 0.0
    %117 = vmatprep.subr.mxu0 0.0
    %118 = vmatpush1.msra.mxu0 0.0
    %119 = vmatprep.subr.mxu0 0.0
    %120 = vmatpush1.msra.mxu0 0.0
    %121 = vmatprep.subr.mxu0 0.0
    %122 = vmatpush1.msra.mxu0 0.0
    %123 = vmatprep.subr.mxu0 0.0
    %124 = vmatpush1.msra.mxu0 0.0
    %125 = vmatprep.subr.mxu0 0.0
    %126 = vmatpush1.msra.mxu0 0.0
    %127 = vmatprep.subr.mxu0 0.0
    %128 = vmatpush1.msra.mxu0 0.0
    %129 = vmatprep.subr.mxu0 0.0
    %130 = vmatpush1.msra.mxu0 0.0
    %131 = vmatprep.subr.mxu0 0.0
    %132 = vmatpush1.msra.mxu0 0.0
    %133 = vmatprep.subr.mxu0 0.0
    %134 = vmatpush1.msra.mxu0 0.0
    %135 = vmatprep.subr.mxu0 0.0
    %136 = vmatpush1.msra.mxu0 0.0
    %137 = vmatprep.subr.mxu0 0.0
    %138 = vmatpush1.msra.mxu0 0.0
    %139 = vmatprep.subr.mxu0 0.0
    %140 = vmatpush1.msra.mxu0 0.0
    %141 = vmatprep.subr.mxu0 0.0
    %142 = vmatpush1.msra.mxu0 0.0
    %143 = vmatprep.subr.mxu0 0.0
    %144 = vmatpush1.msra.mxu0 0.0
    %145 = vmatprep.subr.mxu0 0.0
    %146 = vmatpush1.msra.mxu0 0.0
    %147 = vmatprep.subr.mxu0 0.0
    %148 = vmatpush1.msra.mxu0 0.0
    %149 = vmatprep.subr.mxu0 0.0
    %150 = vmatpush1.msra.mxu0 0.0
    %151 = vmatprep.subr.mxu0 0.0
    %152 = vmatpush1.msra.mxu0 0.0
    %153 = vmatprep.mubr.f32.mxu0 0.0
    %154 = vmatmul.mubr.f32.gmra.mrb[0].mxu0 %v84
    %v155 = vpop.f32.mrb[0].mxu0
    %v156 = vadd.f32 %v80, %v155
    %v157 = vpop.f32.mrb[0].mxu0
    %158 = vmatprep.mubr.f32.mxu0 0.0
    %159 = vmatmul.mubr.f32.gmra.mrb[0].mxu0 %v87
    %v160 = vpop.f32.mrb[0].mxu0
    %v161 = vadd.f32 %v80, %v160
    %v162 = vpop.f32.mrb[0].mxu0
    %163 = vdwg.mxu0
    %v164 = vmax.f32 %v156, 0.0
    %v165 = vmax.f32 %v161, 0.0
    %v166 = vld [vmem:[#allocation2] sm:$0xff]
    %v167 = vld [vmem:[#allocation2 + $0x8] sm:$0xff]
    %v168 = vld [vmem:[#allocation8] sm:$0xff]
    %v169 = vld [vmem:[#allocation8 + $0x8] sm:$0xff]
    %v170 = vld [vmem:[#allocation8 + $0x10] sm:$0xff]
    %v171 = vld [vmem:[#allocation8 + $0x18] sm:$0xff]
    %v173 = vsel %vm82, %v164, 0
    %v176 = vsel %vm82, %v165, 0
    %178 = vmatprep.subr.mxu0 0.0
    %179 = vmatpush1.msra.mxu0 %v168
    %180 = vmatprep.subr.mxu0 0.0
    %181 = vmatpush1.msra.mxu0 %v169
    %182 = vmatprep.subr.mxu0 0.0
    %183 = vmatpush1.msra.mxu0 %v170
    %184 = vmatprep.subr.mxu0 0.0
    %185 = vmatpush1.msra.mxu0 %v171
    %186 = vmatprep.subr.mxu0 0.0
    %187 = vmatpush1.msra.mxu0 0.0
    %188 = vmatprep.subr.mxu0 0.0
    %189 = vmatpush1.msra.mxu0 0.0
    %190 = vmatprep.subr.mxu0 0.0
    %191 = vmatpush1.msra.mxu0 0.0
    %192 = vmatprep.subr.mxu0 0.0
    %193 = vmatpush1.msra.mxu0 0.0
    %194 = vmatprep.subr.mxu0 0.0
    %195 = vmatpush1.msra.mxu0 0.0
    %196 = vmatprep.subr.mxu0 0.0
    %197 = vmatpush1.msra.mxu0 0.0
    %198 = vmatprep.subr.mxu0 0.0
    %199 = vmatpush1.msra.mxu0 0.0
    %200 = vmatprep.subr.mxu0 0.0
    %201 = vmatpush1.msra.mxu0 0.0
    %202 = vmatprep.subr.mxu0 0.0
    %203 = vmatpush1.msra.mxu0 0.0
    %204 = vmatprep.subr.mxu0 0.0
    %205 = vmatpush1.msra.mxu0 0.0
    %206 = vmatprep.subr.mxu0 0.0
    %207 = vmatpush1.msra.mxu0 0.0
    %208 = vmatprep.subr.mxu0 0.0
    %209 = vmatpush1.msra.mxu0 0.0
    %210 = vmatprep.subr.mxu0 0.0
    %211 = vmatpush1.msra.mxu0 0.0
    %212 = vmatprep.subr.mxu0 0.0
    %213 = vmatpush1.msra.mxu0 0.0
    %214 = vmatprep.subr.mxu0 0.0
    %215 = vmatpush1.msra.mxu0 0.0
    %216 = vmatprep.subr.mxu0 0.0
    %217 = vmatpush1.msra.mxu0 0.0
    %218 = vmatprep.subr.mxu0 0.0
    %219 = vmatpush1.msra.mxu0 0.0
    %220 = vmatprep.subr.mxu0 0.0
    %221 = vmatpush1.msra.mxu0 0.0
    %222 = vmatprep.subr.mxu0 0.0
    %223 = vmatpush1.msra.mxu0 0.0
    %224 = vmatprep.subr.mxu0 0.0
    %225 = vmatpush1.msra.mxu0 0.0
    %226 = vmatprep.subr.mxu0 0.0
    %227 = vmatpush1.msra.mxu0 0.0
    %228 = vmatprep.subr.mxu0 0.0
    %229 = vmatpush1.msra.mxu0 0.0
    %230 = vmatprep.subr.mxu0 0.0
    %231 = vmatpush1.msra.mxu0 0.0
    %232 = vmatprep.subr.mxu0 0.0
    %233 = vmatpush1.msra.mxu0 0.0
    %234 = vmatprep.subr.mxu0 0.0
    %235 = vmatpush1.msra.mxu0 0.0
    %236 = vmatprep.subr.mxu0 0.0
    %237 = vmatpush1.msra.mxu0 0.0
    %238 = vmatprep.subr.mxu0 0.0
    %239 = vmatpush1.msra.mxu0 0.0
    %240 = vmatprep.subr.mxu0 0.0
    %241 = vmatpush1.msra.mxu0 0.0
    %242 = vmatprep.mubr.f32.mxu0 0.0
    %243 = vmatmul.mubr.f32.gmra.mrb[0].mxu0 %v173
    %v244 = vpop.f32.mrb[0].mxu0
    %v245 = vadd.f32 0.0, %v244
    %v246 = vpop.f32.mrb[0].mxu0
    %247 = vmatprep.mubr.f32.mxu0 0.0
    %248 = vmatmul.mubr.f32.gmra.mrb[0].mxu0 %v176
    %v249 = vpop.f32.mrb[0].mxu0
    %v250 = vadd.f32 0.0, %v249
    %v251 = vpop.f32.mrb[0].mxu0
    %252 = vdwg.mxu0
    %v253 = vadd.f32 %v166, %v245
    %v254 = vadd.f32 %v167, %v250
    %255 = vst.msk [vmem:[#allocation2] sm:$0xff] %vm82, %v253
    %256 = vst.msk [vmem:[#allocation2 + $0x8] sm:$0xff] %vm82, %v254
    // Predicated region
    $region38: #{ffn_forward.1} parent=1 // pred_check
      %p257 = pneg %p62
    $region39: #{ffn_forward.1} parent=1 // pred_check_branch
      %259 = sbr.rel (%p257) target = $region41
    $region40: #{ffn_forward.1} parent=1 // pred_region
      %v260 = vld [vmem:[%s4] sm:$0x1]
      %v261 = vld [vmem:[%s4 + $0x1] sm:$0x1]
      %v262 = vld [vmem:[%s4 + $0x2] sm:$0x1]
      %v263 = vld [vmem:[#allocation2] sm:$0xff]
      %v264 = vld [vmem:[#allocation2 + $0x8] sm:$0xff]
      %v265 = vadd.f32 %v69, %v263
      %v266 = vadd.f32 %v70, %v264
      %v267 = vlaneseq
      %v268 = vshrl.u32 %v267, 7
      %v269 = vsub.s32 0, %v268
      %v270 = vrot.slane %v260, %v269
      %v271 = vadd.f32 %v265, %v270
      %v272 = vadd.f32 %v266, %v270
      %v273 = vsel %vm82, %v271, 0.0
      %274 = vadd.xlane.f32.xlu0 %v273
      %v275 = vpop.xlane.xlu0 %274
      %v276 = vsel %vm82, %v272, 0.0
      %277 = vadd.xlane.f32.xlu0 %v276
      %v278 = vpop.xlane.xlu0 %277
      %v279 = vrcp.pop 32.0
      %v280 = vmul.f32 %v275, %v279
      %v281 = vmul.f32 %v278, %v279
      %v282 = vmul.f32 %v271, %v271
      %v283 = vmul.f32 %v272, %v272
      %v284 = vsel %vm82, %v282, 0.0
      %285 = vadd.xlane.f32.xlu0 %v284
      %v286 = vpop.xlane.xlu0 %285
      %v287 = vsel %vm82, %v283, 0.0
      %288 = vadd.xlane.f32.xlu0 %v287
      %v289 = vpop.xlane.xlu0 %288
      %v290 = vmul.f32 %v286, %v279
      %v291 = vmul.f32 %v289, %v279
      %v292 = vmul.f32 %v280, %v280
      %v293 = vmul.f32 %v281, %v281
      %v294 = vsub.f32 %v290, %v292
      %v295 = vsub.f32 %v291, %v293
      %v296 = vsub.f32 %v271, %v280
      %v297 = vsub.f32 %v272, %v281
      %v298 = vadd.f32 %v294, 1e-05
      %v299 = vadd.f32 %v295, 1e-05
      %v300 = vrsqrt.pop %v298
      %v301 = vrsqrt.pop %v299
      %v302 = vmul.f32 %v296, %v300
      %v303 = vmul.f32 %v297, %v301
      %v304 = vlaneseq
      %v305 = vshrl.u32 %v304, 7
      %v306 = vsub.s32 0, %v305
      %v307 = vrot.slane %v261, %v306
      %v308 = vmul.f32 %v302, %v307
      %v309 = vmul.f32 %v303, %v307
      %v310 = vlaneseq
      %v311 = vshrl.u32 %v310, 7
      %v312 = vsub.s32 0, %v311
      %v313 = vrot.slane %v262, %v312
      %v314 = vadd.f32 %v308, %v313
      %v315 = vadd.f32 %v309, %v313
      %316 = vst.msk [vmem:[#allocation9] sm:$0xff] %vm82, %v314
      %317 = vst.msk [vmem:[#allocation9 + $0x8] sm:$0xff] %vm82, %v315
    $region41: #{ffn_forward.1} parent=1 // pred_fallthru
      _
    // Predicated region
    $region42: #{ffn_forward.1} parent=1 // pred_check
      _
    $region43: #{ffn_forward.1} parent=1 // pred_check_branch
      %319 = sbr.rel (0) target = $region45
    $region44: #{ffn_forward.1} parent=1 // pred_region
      %s321 = ssub.s32 256, 256
      %322 = vsyncadd [#allocation5], %s321
      %s323 = sshll.u32 [#allocation9], 4
      %s324 = int_to_ptr.vmem [resolvable:$true] %s323
      %329 = dma.vmem_to_hbm [thread:$0]  %s324, 256, %s5, [#allocation5], 128, 128, 8
    $region45: #{ffn_forward.1} parent=1 // pred_fallthru
      _
    // Predicated region
    $region46: #{ffn_forward.1} parent=1 // pred_check
      _
    $region47: #{ffn_forward.1} parent=1 // pred_check_branch
      %331 = sbr.rel (0) target = $region49
    $region48: #{ffn_forward.1} parent=1 // pred_region
      %332 = dma.done [#allocation5], 256
    $region49: #{ffn_forward.1} parent=1 // pred_fallthru
      _
    %333 = vsyncpa [#allocation4], 1
    %334 = vsyncpa [#allocation7], 1
    %335 = vsyncpa [#allocation5], 1

</llo_original>
